<compile_context>
chip_gen: v6e
topology: v6e:2x2x1
jax: 0.10.0
libtpu: 0.0.40
codegen_flags: <defaults>
</compile_context>

<pallas_src>
import functools
import math

import jax
import jax.numpy as jnp
from jax.experimental import pallas as pl
from jax.experimental.pallas import tpu as pltpu


# row indices inside the packed per-layer vector tensor (L, 16, d_model), f32
VEC_SA_Q_B, VEC_SA_K_B, VEC_SA_V_B, VEC_SA_O_B = 0, 1, 2, 3
VEC_SA_LN_G, VEC_SA_LN_B = 4, 5
VEC_CA_Q_B, VEC_CA_K_B, VEC_CA_V_B, VEC_CA_O_B = 6, 7, 8, 9
VEC_CA_LN_G, VEC_CA_LN_B = 10, 11
VEC_FC2_B, VEC_F_LN_G, VEC_F_LN_B = 12, 13, 14
NUM_VEC_ROWS = 16  # row 15 is zero padding (sublane-tile aligned)

# order of the stacked per-layer tensors fed to the fused decoder kernel
LAYER_PARAM_NAMES = (
    "sa_qk_w", "sa_v_w", "sa_o_w",
    "ca_q_w", "ca_k_w", "ca_v_w", "ca_o_w",
    "fc1_w", "fc2_w", "fc1_b", "vec",
)


# ---------------------------------------------------------------------------
# in-kernel helpers
# ---------------------------------------------------------------------------
def _layer_norm(x, g, b, eps=1e-5):
    mu = jnp.mean(x, axis=-1, keepdims=True)
    var = jnp.mean((x - mu) ** 2, axis=-1, keepdims=True)
    return (x - mu) * jax.lax.rsqrt(var + eps) * g + b


def _softmax(s):
    # max-subtract + exp (VPU/EUP) + EUP reciprocal instead of a VPU divide.
    m = jnp.max(s, axis=-1, keepdims=True)
    e = jnp.exp(s - m)
    return e * pl.reciprocal(jnp.sum(e, axis=-1, keepdims=True), approx=True)


def _mha(q3, k3, v3, wo, bo, num_heads):
    """Multi-head attention on pre-projected q/k/v (f32, shape (TB, N, D)).

    Per-head matmuls are batched over the batch block (single batch-dim
    dot_general, bf16 operands, f32 accumulation).  No K transpose and no
    head concat: each head accumulates through the matching row-slice of wo.
    Returns the output projection result, flattened to (TB*Nq, D) f32.
    """
    tb, nq, d = q3.shape
    hd = d // num_heads
    bf = jnp.bfloat16
    q3 = q3.astype(bf)
    k3 = k3.astype(bf)
    v3 = v3.astype(bf)
    out = jnp.zeros((tb * nq, d), jnp.float32)
    for h in range(num_heads):  # static unroll over a tiny head count
        sl = slice(h * hd, (h + 1) * hd)
        scores = jax.lax.dot_general(
            q3[:, :, sl], k3[:, :, sl],
            (((2,), (2,)), ((0,), (0,))),
            preferred_element_type=jnp.float32)          # (TB, Nq, Nk) f32
        probs = _softmax(scores)
        ctx = jax.lax.dot_general(
            probs.astype(bf), v3[:, :, sl],
            (((2,), (1,)), ((0,), (0,))),
            preferred_element_type=jnp.float32)          # (TB, Nq, hd) f32
        out = out + jnp.dot(
            ctx.reshape(tb * nq, hd).astype(wo.dtype), wo[sl, :],
            preferred_element_type=jnp.float32)
    return out + bo


# ---------------------------------------------------------------------------
# kernels
# ---------------------------------------------------------------------------
def linear_kernel(x_ref, w_ref, b_ref, o_ref):
    o_ref[...] = (
        jnp.dot(x_ref[...], w_ref[...], preferred_element_type=jnp.float32)
        + b_ref[...]
    ).astype(o_ref.dtype)


def fused_decoder_kernel(
    num_heads, num_layers,
    # activations
    qpos_ref, enc_ref, encpos_ref,
    # stacked per-layer weights (leading layer axis streamed over grid dim 1)
    sa_qk_w, sa_v_w, sa_o_w,
    ca_q_w, ca_k_w, ca_v_w, ca_o_w,
    fc1_w, fc2_w, fc1_b, vec_ref,
    # final decoder LayerNorm + llm_proj
    fin_g, fin_b, llm_w, llm_b,
    # output
    out_ref,
    # scratch: decoder hidden state block, resident in VMEM across layer iters
    h_scratch,
):
    layer = pl.program_id(1)

    # object queries start as zeros for every batch element
    @pl.when(layer == 0)
    def _():
        h_scratch[...] = jnp.zeros_like(h_scratch)

    tb, nq, d = h_scratch.shape
    ns = enc_ref.shape[1]
    bf = jnp.bfloat16

    vec = vec_ref[0]                 # (16, D) f32 packed biases / LN params
    qpos = qpos_ref[0]               # (Q, D) learned query position embeddings

    h = h_scratch[...]               # (TB, Q, D) f32 decoder hidden state
    hf = h.reshape(tb * nq, d)

    # --- self-attention (q/k carry query position embeddings, v does not) ---
    hq_bf = (h + qpos[None]).reshape(tb * nq, d).astype(bf)   # shared by q & k
    qk = jnp.dot(hq_bf, sa_qk_w[0], preferred_element_type=jnp.float32)
    # scaling is pre-folded into the q weights/bias at parameter-prep time
    q = (qk[:, :d] + vec[VEC_SA_Q_B:VEC_SA_Q_B + 1]).reshape(tb, nq, d)
    k = (qk[:, d:] + vec[VEC_SA_K_B:VEC_SA_K_B + 1]).reshape(tb, nq, d)
    v = (jnp.dot(hf.astype(bf), sa_v_w[0], preferred_element_type=jnp.float32)
         + vec[VEC_SA_V_B:VEC_SA_V_B + 1]).reshape(tb, nq, d)
    attn = _mha(q, k, v, sa_o_w[0], vec[VEC_SA_O_B:VEC_SA_O_B + 1], num_heads)
    hf = _layer_norm(hf + attn,
                     vec[VEC_SA_LN_G:VEC_SA_LN_G + 1],
                     vec[VEC_SA_LN_B:VEC_SA_LN_B + 1])

    # --- cross-attention: q = h + qpos, k = enc + sine_pos, v = enc ---
    h = hf.reshape(tb, nq, d)
    q = (jnp.dot((h + qpos[None]).reshape(tb * nq, d).astype(bf), ca_q_w[0],
                 preferred_element_type=jnp.float32)
         + vec[VEC_CA_Q_B:VEC_CA_Q_B + 1]).reshape(tb, nq, d)
    encpos_f = encpos_ref[...].reshape(tb * ns, d)            # bf16
    enc_f = enc_ref[...].reshape(tb * ns, d)                  # bf16
    k = (jnp.dot(encpos_f, ca_k_w[0], preferred_element_type=jnp.float32)
         + vec[VEC_CA_K_B:VEC_CA_K_B + 1]).reshape(tb, ns, d)
    v = (jnp.dot(enc_f, ca_v_w[0], preferred_element_type=jnp.float32)
         + vec[VEC_CA_V_B:VEC_CA_V_B + 1]).reshape(tb, ns, d)
    attn = _mha(q, k, v, ca_o_w[0], vec[VEC_CA_O_B:VEC_CA_O_B + 1], num_heads)
    hf = _layer_norm(hf + attn,
                     vec[VEC_CA_LN_G:VEC_CA_LN_G + 1],
                     vec[VEC_CA_LN_B:VEC_CA_LN_B + 1])

    # --- FFN (relu activation, DetrConfig default) ---
    ff = jnp.dot(hf.astype(bf), fc1_w[0], preferred_element_type=jnp.float32) + fc1_b[0]
    ff = jnp.maximum(ff, 0.0)
    ff = jnp.dot(ff.astype(bf), fc2_w[0], preferred_element_type=jnp.float32) \
        + vec[VEC_FC2_B:VEC_FC2_B + 1]
    hf = _layer_norm(hf + ff,
                     vec[VEC_F_LN_G:VEC_F_LN_G + 1],
                     vec[VEC_F_LN_B:VEC_F_LN_B + 1])

    h_scratch[...] = hf.reshape(tb, nq, d)

    # final decoder LayerNorm + llm_proj fused into the last layer iteration;
    # the output block goes back to HBM only once per batch block (its index
    # map ignores the layer axis, so the writeback happens when `b` changes).
    @pl.when(layer == num_layers - 1)
    def _():
        hn = _layer_norm(hf, fin_g[...], fin_b[...])
        out = (jnp.dot(hn.astype(bf), llm_w[...], preferred_element_type=jnp.float32)
               + llm_b[...])
        out_ref[...] = out.reshape(tb, nq, -1)


# ---------------------------------------------------------------------------
# pallas_call wrappers
# ---------------------------------------------------------------------------
def pallas_linear(x, w, b, out_dtype=jnp.bfloat16, tm=512):
    """Row-tiled linear: 512-row tiles pipeline well against the HBM roofline."""
    n, din = x.shape
    dout = w.shape[1]
    tm = min(tm, n)
    return pl.pallas_call(
        linear_kernel,
        out_shape=jax.ShapeDtypeStruct((n, dout), out_dtype),
        grid=(pl.cdiv(n, tm),),
        in_specs=[
            pl.BlockSpec((tm, din), lambda i: (i, 0)),
            pl.BlockSpec((din, dout), lambda i: (0, 0)),
            pl.BlockSpec((1, dout), lambda i: (0, 0)),
        ],
        out_specs=pl.BlockSpec((tm, dout), lambda i: (i, 0)),
        compiler_params=pltpu.CompilerParams(dimension_semantics=("parallel",)),
    )(x, w, b)


def pallas_detr_decoder(query_pos, enc, enc_pos, params, num_heads, block_batch=8):
    """One pallas_call for the whole decoder stack + final LN + llm_proj.

    grid = (B // TB, num_layers): batch-block axis "parallel" (megacore),
    layer axis "arbitrary" (sequential; hidden state carried in VMEM scratch,
    per-layer weights streamed / double-buffered over it).

    NOTE: the VMEM-scratch hidden-state carry is only correct because the layer
    axis is the innermost, sequentially-iterated ("arbitrary") grid axis and is
    re-zeroed at layer == 0; do not reorder the grid axes.
    """
    _, Q, D = query_pos.shape
    B, S, _ = enc.shape
    layers = params["layers"]
    L = layers["sa_qk_w"].shape[0]
    P = params["llm_w"].shape[1]
    assert D % num_heads == 0

    # batch blocking: amortizes per-layer weight DMA by TB and fills the MXU M dim.
    tb = min(block_batch, B)
    while B % tb != 0:
        tb -= 1

    per_batch = lambda b, l: (b, 0, 0)   # batched activations / output
    shared3 = lambda b, l: (0, 0, 0)     # query pos embeddings (batch-invariant)
    per_layer = lambda b, l: (l, 0, 0)   # stacked per-layer weights
    const2 = lambda b, l: (0, 0)         # final LN / llm_proj weights

    mats = [layers[name] for name in LAYER_PARAM_NAMES]

    in_specs = (
        [pl.BlockSpec((1, Q, D), shared3),
         pl.BlockSpec((tb, S, D), per_batch),
         pl.BlockSpec((tb, S, D), per_batch)]
        + [pl.BlockSpec((1,) + m.shape[1:], per_layer) for m in mats]
        + [pl.BlockSpec(params["ln_g"].shape, const2),
           pl.BlockSpec(params["ln_b"].shape, const2),
           pl.BlockSpec(params["llm_w"].shape, const2),
           pl.BlockSpec(params["llm_b"].shape, const2)]
    )

    kernel = functools.partial(fused_decoder_kernel, num_heads, L)
    return pl.pallas_call(
        kernel,
        out_shape=jax.ShapeDtypeStruct((B, Q, P), jnp.float32),
        grid=(B // tb, L),
        in_specs=in_specs,
        out_specs=pl.BlockSpec((tb, Q, P), per_batch),
        scratch_shapes=[pltpu.VMEM((tb, Q, D), jnp.float32)],
        compiler_params=pltpu.CompilerParams(
            dimension_semantics=("parallel", "arbitrary"),
            # fits v7x's 64 MiB per-TC VMEM while using more of v5e/v6e's 128 MiB;
            # per-layer weights are streamed, so this also scales to real DETR sizes.
            vmem_limit_bytes=48 * 1024 * 1024,
        ),
    )(query_pos, enc, enc_pos, *mats,
      params["ln_g"], params["ln_b"], params["llm_w"], params["llm_b"])


# ---------------------------------------------------------------------------
# sine position embedding (DetrSinePositionEmbedding, normalize=True) — glue
# ---------------------------------------------------------------------------
def sine_position_embedding(bs, h, w, d_model):
    n = d_model // 2
    scale = 2.0 * math.pi
    eps = 1e-6
    ones = jnp.ones((bs, h, w), jnp.float32)
    y_embed = jnp.cumsum(ones, axis=1)
    x_embed = jnp.cumsum(ones, axis=2)
    y_embed = y_embed / (y_embed[:, -1:, :] + eps) * scale
    x_embed = x_embed / (x_embed[:, :, -1:] + eps) * scale
    dim_t = jnp.arange(n, dtype=jnp.float32)
    dim_t = 10000.0 ** (2.0 * jnp.floor(dim_t / 2.0) / n)
    pos_x = x_embed[:, :, :, None] / dim_t
    pos_y = y_embed[:, :, :, None] / dim_t
    pos_x = jnp.stack(
        (jnp.sin(pos_x[:, :, :, 0::2]), jnp.cos(pos_x[:, :, :, 1::2])), axis=4
    ).reshape(bs, h, w, n)
    pos_y = jnp.stack(
        (jnp.sin(pos_y[:, :, :, 0::2]), jnp.cos(pos_y[:, :, :, 1::2])), axis=4
    ).reshape(bs, h, w, n)
    pos = jnp.concatenate((pos_y, pos_x), axis=3)  # (bs, h, w, d_model)
    return pos.reshape(bs, h * w, d_model)


# ---------------------------------------------------------------------------
# parameter init (deterministic, synthetic)
# ---------------------------------------------------------------------------
def _dense(key, din, dout, scale=0.02):
    kw, kb = jax.random.split(key)
    w = jax.random.normal(kw, (din, dout), jnp.float32) * scale
    b = jax.random.normal(kb, (dout,), jnp.float32) * scale
    return w, b


def init_params(key, vision_width, d_model, ffn_dim, num_layers, num_queries,
                hidden_size_projector, num_heads, w_dtype=jnp.bfloat16):
    keys = jax.random.split(key, 4 + num_layers)
    in_w, in_b = _dense(keys[0], vision_width, d_model)
    query_pos = (
        jax.random.normal(keys[1], (1, num_queries, d_model), jnp.float32) * 0.02
    )
    llm_w, llm_b = _dense(keys[2], d_model, hidden_size_projector)

    ln_g = jnp.ones((1, d_model), jnp.float32)
    ln_b = jnp.zeros((1, d_model), jnp.float32)
    ln1 = jnp.ones((d_model,), jnp.float32)
    ln0 = jnp.zeros((d_model,), jnp.float32)
    pad = jnp.zeros((d_model,), jnp.float32)

    scaling = float((d_model // num_heads) ** -0.5)

    stacked = {name: [] for name in LAYER_PARAM_NAMES}
    for li in range(num_layers):
        lk = jax.random.split(keys[4 + li], 10)
        saq_w, saq_b = _dense(lk[0], d_model, d_model)
        sak_w, sak_b = _dense(lk[1], d_model, d_model)
        sav_w, sav_b = _dense(lk[2], d_model, d_model)
        sao_w, sao_b = _dense(lk[3], d_model, d_model)
        caq_w, caq_b = _dense(lk[4], d_model, d_model)
        cak_w, cak_b = _dense(lk[5], d_model, d_model)
        cav_w, cav_b = _dense(lk[6], d_model, d_model)
        cao_w, cao_b = _dense(lk[7], d_model, d_model)
        fc1_w, fc1_b = _dense(lk[8], d_model, ffn_dim)
        fc2_w, fc2_b = _dense(lk[9], ffn_dim, d_model)

        # fold the attention scaling factor into the q projections (w + b)
        saq_w, saq_b = saq_w * scaling, saq_b * scaling
        caq_w, caq_b = caq_w * scaling, caq_b * scaling

        # packed per-layer vectors: (16, d_model) f32 (row 15 is padding)
        vec = jnp.stack(
            [saq_b, sak_b, sav_b, sao_b, ln1, ln0,
             caq_b, cak_b, cav_b, cao_b, ln1, ln0,
             fc2_b, ln1, ln0, pad], axis=0)

        vals = {
            "sa_qk_w": jnp.concatenate([saq_w, sak_w], axis=1).astype(w_dtype),
            "sa_v_w": sav_w.astype(w_dtype),
            "sa_o_w": sao_w.astype(w_dtype),
            "ca_q_w": caq_w.astype(w_dtype),
            "ca_k_w": cak_w.astype(w_dtype),
            "ca_v_w": cav_w.astype(w_dtype),
            "ca_o_w": cao_w.astype(w_dtype),
            "fc1_w": fc1_w.astype(w_dtype),
            "fc2_w": fc2_w.astype(w_dtype),
            "fc1_b": fc1_b.reshape(1, ffn_dim),
            "vec": vec,
        }
        for name in LAYER_PARAM_NAMES:
            stacked[name].append(vals[name])

    layers = {name: jnp.stack(v, axis=0) for name, v in stacked.items()}

    return {
        "in_w": in_w.astype(w_dtype), "in_b": in_b.reshape(1, d_model),
        "query_pos": query_pos,        # (1, num_queries, d_model) f32
        "layers": layers,              # each entry has leading layer axis
        "ln_g": ln_g, "ln_b": ln_b,    # final decoder LayerNorm
        "llm_w": llm_w.astype(w_dtype),
        "llm_b": llm_b.reshape(1, hidden_size_projector),
    }


# ---------------------------------------------------------------------------
# forward (DETRconnector.forward, pre_captions_tuple=None)
# ---------------------------------------------------------------------------
def detr_connector_forward(image_features, params, num_heads):
    bs, num_tokens, vw = image_features.shape
    d_model = params["in_w"].shape[1]
    h2d = w2d = int(round(num_tokens ** 0.5))
    assert h2d * w2d == num_tokens, "image features must be a perfect square"

    # 1. input projection (row-tiled Pallas linear, bf16 in / bf16 out)
    proj = pallas_linear(
        image_features.reshape(bs * num_tokens, vw).astype(jnp.bfloat16),
        params["in_w"], params["in_b"],
    ).reshape(bs, num_tokens, d_model)                       # bf16

    # 2. sine position embedding (all-ones pixel mask, normalize=True)
    pos_flat = sine_position_embedding(bs, h2d, w2d, d_model)
    # hoisted cross-attention key input: h-invariant and layer-invariant; bf16
    enc_pos = (proj.astype(jnp.float32) + pos_flat).astype(jnp.bfloat16)

    # 3.+4. fused decoder stack + final LayerNorm + llm projection
    #        (slice [:num_queries] is the whole decoder sequence here)
    return pallas_detr_decoder(params["query_pos"], proj, enc_pos, params, num_heads)


if __name__ == "__main__":
    # small config consistent with the module
    bs = 2
    num_tokens = 16            # 4 x 4 patches
    vision_width = 32          # == d_model
    d_model = vision_width
    detr_num_hidden_layers = 2
    detr_num_attention_heads = 4
    detr_intermediate_size = 64
    detr_num_queries = 8
    hidden_size_projector = 32

    key = jax.random.PRNGKey(0)
    k_params, k_x = jax.random.split(key)
    params = init_params(
        k_params, vision_width, d_model, detr_intermediate_size,
        detr_num_hidden_layers, detr_num_queries, hidden_size_projector,
        detr_num_attention_heads,
    )
    image_features = jax.random.normal(
        k_x, (bs, num_tokens, vision_width), jnp.float32
    )

    out = detr_connector_forward(image_features, params, detr_num_attention_heads)
    out = jax.block_until_ready(out)
    assert out.shape == (bs, detr_num_queries, hidden_size_projector), out.shape
    assert bool(jnp.all(jnp.isfinite(out)))
    print("KERNEL_OK")
</pallas_src>

<mosaic_0001>
module attributes {stable_mosaic.version = 11 : i64} {
  func.func @linear_kernel(%arg0: i32, %arg1: memref<32x32xbf16, #tpu.memory_space<vmem>>, %arg2: memref<32x32xbf16, #tpu.memory_space<vmem>>, %arg3: memref<1x32xf32, #tpu.memory_space<vmem>>, %arg4: memref<32x32xbf16, #tpu.memory_space<vmem>>) attributes {dimension_semantics = [#tpu.dimension_semantics<parallel>], iteration_bounds = array<i64: 1>, scalar_prefetch = 0 : i64, scratch_operands = 0 : i64, tpu.core_type = #tpu.core_type<tc>, window_params = [{transform_indices = @transform_0, window_bounds = array<i64: 32, 32>}, {pipeline_mode = #tpu.pipeline_mode<synchronous>, transform_indices = @transform_1, window_bounds = array<i64: 32, 32>}, {pipeline_mode = #tpu.pipeline_mode<synchronous>, transform_indices = @transform_2, window_bounds = array<i64: 1, 32>}, {transform_indices = @transform_3, window_bounds = array<i64: 32, 32>}]} {
    %c0 = arith.constant 0 : index
    %c0_0 = arith.constant 0 : index
    %0 = vector.load %arg1[%c0, %c0_0] : memref<32x32xbf16, #tpu.memory_space<vmem>>, vector<32x32xbf16>
    %c0_1 = arith.constant 0 : index
    %c0_2 = arith.constant 0 : index
    %1 = vector.load %arg2[%c0_1, %c0_2] : memref<32x32xbf16, #tpu.memory_space<vmem>>, vector<32x32xbf16>
    %cst = arith.constant dense<0.000000e+00> : vector<32x32xf32>
    %2 = tpu.matmul %0, %1, %cst {dimension_numbers = #tpu.dot_dimension_numbers<[1], [0], [0], [1], [0, 0, 1, 1], [], []>} : vector<32x32xbf16>, vector<32x32xbf16>, vector<32x32xf32> -> vector<32x32xf32>
    %c0_3 = arith.constant 0 : index
    %c0_4 = arith.constant 0 : index
    %3 = vector.load %arg3[%c0_3, %c0_4] : memref<1x32xf32, #tpu.memory_space<vmem>>, vector<1x32xf32>
    %4 = vector.broadcast %3 : vector<1x32xf32> to vector<32x32xf32>
    %5 = arith.addf %2, %4 : vector<32x32xf32>
    %6 = arith.truncf %5 : vector<32x32xf32> to vector<32x32xbf16>
    %c0_5 = arith.constant 0 : index
    %c0_6 = arith.constant 0 : index
    %7 = vector.load %arg4[%c0_5, %c0_6] : memref<32x32xbf16, #tpu.memory_space<vmem>>, vector<32x32xbf16>
    tpu.vector_store %arg4[%c0_5, %c0_6], %6 {strides = array<i32>} : memref<32x32xbf16, #tpu.memory_space<vmem>>, vector<32x32xbf16>,
    return
  }
  func.func @transform_0(%arg0: i32) -> (i32, i32) {
    %c0_i32 = arith.constant 0 : i32
    %c0_i32_0 = arith.constant 0 : i32
    return %arg0, %c0_i32 : i32, i32
  }
  func.func @transform_1(%arg0: i32) -> (i32, i32) {
    %c0_i32 = arith.constant 0 : i32
    %c0_i32_0 = arith.constant 0 : i32
    %c0_i32_1 = arith.constant 0 : i32
    return %c0_i32, %c0_i32_0 : i32, i32
  }
  func.func @transform_2(%arg0: i32) -> (i32, i32) {
    %c0_i32 = arith.constant 0 : i32
    %c0_i32_0 = arith.constant 0 : i32
    %c0_i32_1 = arith.constant 0 : i32
    return %c0_i32, %c0_i32_0 : i32, i32
  }
  func.func @transform_3(%arg0: i32) -> (i32, i32) {
    %c0_i32 = arith.constant 0 : i32
    %c0_i32_0 = arith.constant 0 : i32
    return %arg0, %c0_i32 : i32, i32
  }
}

</mosaic_0001>

<llo_original>
// kernel: tpu_custom_call.1
$region0: #{tpu_custom_call.1}
  #allocation0 [shape = 'u32[]', space=smem, size = 0x4, offset = 0x4, fixed_abs, tag = 'smem constant byte address 0x4 - core index']
  #allocation1 [shape = 'u32[144,128]{1,0:T(1,128)}', space=vmem, size = 0x12000, scoped, tag = 'internal scratch']
  %s0 = inlined_call_operand.hbm [shape: bf16[32,32], index: 0, kind: input, shape index: {}]
  %s1 = inlined_call_operand.hbm [shape: bf16[32,32], index: 1, kind: input, shape index: {}]
  %s2 = inlined_call_operand.vmem [shape: f32[1,32], index: 2, kind: input, shape index: {}]
  %s3 = inlined_call_operand.hbm [shape: bf16[32,32], index: 3, kind: output, shape index: {}]
  %s4 = sld [smem:[#allocation0]]
  $region30: #{tpu_custom_call.1} parent=0
    _
  %s6 = ssub.s32 1, %s4
  %s7 = scalar_select 0, %s6, %s4
  $region1: #{tpu_custom_call.1} parent=0
    #allocation2 [shape = 'u8[8192]{0}', space=vmem, size = 0x2000, scoped, tag = 'input window, operand 0, single buffered']
    #allocation3 [shape = 's32[1]{0}', space=sflag, size = 0x4, scoped, tag = 'scoped memory for tpu_custom_call.1']
    #allocation4 [shape = 's32[1]{0}', space=sflag, size = 0x4, scoped, tag = 'scoped memory for tpu_custom_call.1']
    #allocation5 [shape = 'u8[8192]{0}', space=vmem, size = 0x2000, scoped, tag = 'input window, operand 1, single buffered']
    #allocation6 [shape = 's32[1]{0}', space=sflag, size = 0x4, scoped, tag = 'scoped memory for tpu_custom_call.1']
    #allocation7 [shape = 'u8[8192]{0}', space=vmem, size = 0x2000, scoped, tag = 'output window, operand 0, single buffered']
    %8 = vsyncpa [#allocation3], 0
    %9 = vsyncpa [#allocation6], 0
    %10 = vsyncpa [#allocation4], 0
    // Predicated region
    $region2: #{tpu_custom_call.1} parent=1 // pred_check
      _
    $region3: #{tpu_custom_call.1} parent=1 // pred_check_branch
      %12 = sbr.rel (0) target = $region5
    $region4: #{tpu_custom_call.1} parent=1 // pred_region
      %s14 = ssub.s32 256, 256
      %15 = vsyncadd [#allocation3], %s14
      %s16 = sshll.u32 [#allocation2], 4
      %s17 = int_to_ptr.vmem [resolvable:$true] %s16
      %22 = dma.hbm_to_vmem [thread:$0]  %s0, 256, %s17, [#allocation3], 64, 64, 4
    $region5: #{tpu_custom_call.1} parent=1 // pred_fallthru
      _
    // Predicated region
    $region6: #{tpu_custom_call.1} parent=1 // pred_check
      _
    $region7: #{tpu_custom_call.1} parent=1 // pred_check_branch
      %24 = sbr.rel (0) target = $region9
    $region8: #{tpu_custom_call.1} parent=1 // pred_region
      %s26 = ssub.s32 256, 256
      %27 = vsyncadd [#allocation6], %s26
      %s28 = sshll.u32 [#allocation5], 4
      %s29 = int_to_ptr.vmem [resolvable:$true] %s28
      %34 = dma.hbm_to_vmem [thread:$0]  %s1, 256, %s29, [#allocation6], 64, 64, 4
    $region9: #{tpu_custom_call.1} parent=1 // pred_fallthru
      _
    // Predicated region
    $region10: #{tpu_custom_call.1} parent=1 // pred_check
      _
    $region11: #{tpu_custom_call.1} parent=1 // pred_check_branch
      %36 = sbr.rel (0) target = $region13
    $region12: #{tpu_custom_call.1} parent=1 // pred_region
      _
    $region13: #{tpu_custom_call.1} parent=1 // pred_fallthru
      _
    // Predicated region
    $region14: #{tpu_custom_call.1} parent=1 // pred_check
      _
    $region15: #{tpu_custom_call.1} parent=1 // pred_check_branch
      %38 = sbr.rel (0) target = $region17
    $region16: #{tpu_custom_call.1} parent=1 // pred_region
      %39 = dma.done [#allocation3], 256
    $region17: #{tpu_custom_call.1} parent=1 // pred_fallthru
      _
    // Predicated region
    $region18: #{tpu_custom_call.1} parent=1 // pred_check
      _
    $region19: #{tpu_custom_call.1} parent=1 // pred_check_branch
      %41 = sbr.rel (0) target = $region21
    $region20: #{tpu_custom_call.1} parent=1 // pred_region
      %42 = dma.done [#allocation6], 256
    $region21: #{tpu_custom_call.1} parent=1 // pred_fallthru
      _
    %v44 = vld [vmem:[#allocation2] sm:$0xf]
    %v45 = vld [vmem:[#allocation2 + $0x4] sm:$0xf]
    %v46 = vld [vmem:[#allocation2 + $0x8] sm:$0xf]
    %v47 = vld [vmem:[#allocation2 + $0xc] sm:$0xf]
    %v48 = vld [vmem:[#allocation5] sm:$0xf]
    %v49 = vld [vmem:[#allocation5 + $0x4] sm:$0xf]
    %v50 = vld [vmem:[#allocation5 + $0x8] sm:$0xf]
    %v51 = vld [vmem:[#allocation5 + $0xc] sm:$0xf]
    %v52 = vld [vmem:[%s2] sm:$0x1]
    %v54 = vlaneseq
    %v55 = vshrl.u32 %v54, 7
    %v56 = vsub.s32 0, %v55
    %v57 = vrot.slane %v52, %v56
    %v63 = vunpack.c.l.b16 %v44
    %v64 = vunpack.c.l.b16 %v45
    %v65 = vunpack.c.l.b16 %v46
    %v66 = vunpack.c.l.b16 %v47
    %v67 = vpack.c.b16 %v64, %v63
    %v68 = vpack.c.b16 %v66, %v65
    %v73 = vunpack.c.l.b16 %v48
    %v74 = vunpack.c.l.b16 %v49
    %v75 = vunpack.c.l.b16 %v50
    %v76 = vunpack.c.l.b16 %v51
    %v77 = vpack.c.b16 %v74, %v73
    %v78 = vpack.c.b16 %v76, %v75
    %vm81 = vcmask 261120
    %v83 = vsel %vm81, %v67, 0
    %v86 = vsel %vm81, %v68, 0
    %88 = vmatprep.subr.bf16.mxu0 0
    %89 = vmatpush1.bf16.msra.mxu0 0
    %90 = vmatprep.subr.bf16.mxu0 0
    %91 = vmatpush1.bf16.msra.mxu0 0
    %92 = vmatprep.subr.bf16.mxu0 0
    %93 = vmatpush1.bf16.msra.mxu0 0
    %94 = vmatprep.subr.bf16.mxu0 0
    %95 = vmatpush1.bf16.msra.mxu0 0
    %96 = vmatprep.subr.bf16.mxu0 0
    %97 = vmatpush1.bf16.msra.mxu0 0
    %98 = vmatprep.subr.bf16.mxu0 0
    %99 = vmatpush1.bf16.msra.mxu0 0
    %100 = vmatprep.subr.bf16.mxu0 0
    %101 = vmatpush1.bf16.msra.mxu0 %v78
    %102 = vmatprep.subr.bf16.mxu0 0
    %103 = vmatpush1.bf16.msra.mxu0 %v77
    %104 = vmatprep.subr.bf16.mxu0 0
    %105 = vmatpush2.bf16.msra.mxu0 0
    %106 = vmatprep.subr.bf16.mxu0 0
    %107 = vmatpush2.bf16.msra.mxu0 0
    %108 = vmatprep.subr.bf16.mxu0 0
    %109 = vmatpush2.bf16.msra.mxu0 0
    %110 = vmatprep.subr.bf16.mxu0 0
    %111 = vmatpush2.bf16.msra.mxu0 0
    %112 = vmatprep.subr.bf16.mxu0 0
    %113 = vmatpush2.bf16.msra.mxu0 0
    %114 = vmatprep.subr.bf16.mxu0 0
    %115 = vmatpush2.bf16.msra.mxu0 0
    %116 = vmatprep.subr.bf16.mxu0 0
    %117 = vmatpush2.bf16.msra.mxu0 0
    %118 = vmatprep.subr.bf16.mxu0 0
    %119 = vmatpush2.bf16.msra.mxu0 0
    %120 = vmatprep.mubr.bf16.mxu0 0
    %121 = vmatmul.mubr.bf16.gmra.mxu0 %v83
    %v122 = vpop.f32.mrf.mxu0
    %v123 = vadd.f32 %v57, %v122
    %v124 = vpop.f32.mrf.mxu0
    %v125 = vpop.f32.mrf.mxu0
    %v126 = vadd.f32 %v57, %v125
    %v127 = vpop.f32.mrf.mxu0
    %128 = vmatprep.mubr.bf16.mxu0 0
    %129 = vmatmul.mubr.bf16.gmra.mxu0 %v86
    %v130 = vpop.f32.mrf.mxu0
    %v131 = vadd.f32 %v57, %v130
    %v132 = vpop.f32.mrf.mxu0
    %v133 = vpop.f32.mrf.mxu0
    %v134 = vadd.f32 %v57, %v133
    %v135 = vpop.f32.mrf.mxu0
    %136 = vdwg.mxu0
    %v137 = vpack.c.bf16 %v126, %v123
    %v138 = vpack.c.bf16 %v134, %v131
    %v141 = vunpack.c.l.b16 %v137
    %v142 = vunpack.c.h.b16 %v137
    %v143 = vunpack.c.l.b16 %v138
    %v144 = vunpack.c.h.b16 %v138
    %v145 = vpack.c.b16 %v141, %v141
    %v146 = vpack.c.b16 %v142, %v142
    %v147 = vpack.c.b16 %v143, %v143
    %v148 = vpack.c.b16 %v144, %v144
    %vm153 = vcmask 257024
    %154 = vst.msk [vmem:[#allocation7] sm:$0xf] %vm153, %v145
    %155 = vst.msk [vmem:[#allocation7 + $0x4] sm:$0xf] %vm153, %v146
    %156 = vst.msk [vmem:[#allocation7 + $0x8] sm:$0xf] %vm153, %v147
    %157 = vst.msk [vmem:[#allocation7 + $0xc] sm:$0xf] %vm153, %v148
    // Predicated region
    $region22: #{tpu_custom_call.1} parent=1 // pred_check
      _
    $region23: #{tpu_custom_call.1} parent=1 // pred_check_branch
      %159 = sbr.rel (0) target = $region25
    $region24: #{tpu_custom_call.1} parent=1 // pred_region
      %s161 = ssub.s32 256, 256
      %162 = vsyncadd [#allocation4], %s161
      %s163 = sshll.u32 [#allocation7], 4
      %s164 = int_to_ptr.vmem [resolvable:$true] %s163
      %169 = dma.vmem_to_hbm [thread:$0]  %s164, 256, %s3, [#allocation4], 64, 64, 4
    $region25: #{tpu_custom_call.1} parent=1 // pred_fallthru
      _
    // Predicated region
    $region26: #{tpu_custom_call.1} parent=1 // pred_check
      _
    $region27: #{tpu_custom_call.1} parent=1 // pred_check_branch
      %171 = sbr.rel (0) target = $region29
    $region28: #{tpu_custom_call.1} parent=1 // pred_region
      %172 = dma.done [#allocation4], 256
    $region29: #{tpu_custom_call.1} parent=1 // pred_fallthru
      _
    %173 = vsyncpa [#allocation3], 1
    %174 = vsyncpa [#allocation6], 1
    %175 = vsyncpa [#allocation4], 1

</llo_original>
